<compile_context>
chip_gen: v7x
topology: tpu7x:2x2x1
jax: 0.10.0
libtpu: 0.0.40
codegen_flags: <defaults>
</compile_context>

<pallas_src>
import numpy as np
import jax
import jax.numpy as jnp
from jax.experimental import pallas as pl
from jax.experimental.pallas import tpu as pltpu


def _scale_exp_smem_kernel(scale_ref, out_ref):
    # Pure scalar path: SMEM load -> exp -> SMEM store.
    # No vreg fill, no VMEM tile, no masked vector store, no output tile DMA.
    out_ref[0] = jnp.exp(scale_ref[0])


def _scale_exp_vmem_fallback_kernel(scale_ref, out_ref):
    # Fallback only: scalar from SMEM, exp on the EUP via a 1x1 vector,
    # full-tile assignment to a (1, 1) VMEM output.
    s = scale_ref[0]
    out_ref[...] = jnp.exp(jnp.full((1, 1), s, dtype=jnp.float32))


def scale_forward(scale_param: jax.Array) -> jax.Array:
    """Equivalent of Scale.forward(): returns exp(scale) as a 0-d float32."""
    scale_1d = jnp.asarray(scale_param, dtype=jnp.float32).reshape(1)

    try:
        # Preferred (per review): everything on the scalar/SMEM path.
        out = pl.pallas_call(
            _scale_exp_smem_kernel,
            out_shape=jax.ShapeDtypeStruct((1,), jnp.float32),
            in_specs=[pl.BlockSpec(memory_space=pltpu.SMEM)],
            out_specs=pl.BlockSpec(memory_space=pltpu.SMEM),
        )(scale_1d)
        out = jax.block_until_ready(out)
        return out.reshape(())
    except Exception:
        # Some Mosaic builds may not lower a scalar-domain exp; fall back to
        # the previously validated SMEM-in / (1,1)-VMEM-out form.
        out = pl.pallas_call(
            _scale_exp_vmem_fallback_kernel,
            out_shape=jax.ShapeDtypeStruct((1, 1), jnp.float32),
            in_specs=[pl.BlockSpec(memory_space=pltpu.SMEM)],
            out_specs=pl.BlockSpec(memory_space=pltpu.VMEM),
        )(scale_1d)
        out = jax.block_until_ready(out)
        return out.reshape(())


def scale_forward_recommended(scale_param: jax.Array) -> jax.Array:
    """The path the performance review recommends: let XLA handle/fuse the exp."""
    return jnp.exp(scale_param)


if __name__ == "__main__":
    # Deterministic parameter init exactly as in the module's __init__:
    #   scale = log(1 / 0.07)
    # (PRNGKey(0) created for protocol consistency; the init is deterministic.)
    _ = jax.random.PRNGKey(0)
    scale_param = jnp.asarray(np.log(1.0 / 0.07), dtype=jnp.float32)

    out = scale_forward(scale_param)
    out = jax.block_until_ready(out)

    expected = np.exp(np.log(1.0 / 0.07)).astype(np.float32)  # == 1/0.07 ≈ 14.2857
    assert out.shape == ()
    assert out.dtype == jnp.float32
    np.testing.assert_allclose(np.asarray(out), expected, rtol=1e-6)

    # Cross-check against the recommended fused/XLA path.
    ref = jax.block_until_ready(scale_forward_recommended(scale_param))
    np.testing.assert_allclose(np.asarray(out), np.asarray(ref), rtol=1e-6)

    print("KERNEL_OK")
</pallas_src>

<mosaic_0001>
module attributes {stable_mosaic.version = 11 : i64} {
  func.func @_scale_exp_smem_kernel(%arg0: memref<1xf32, #tpu.memory_space<smem>>, %arg1: memref<1xf32, #tpu.memory_space<smem>>) attributes {dimension_semantics = [], scalar_prefetch = 0 : i64, scratch_operands = 0 : i64, tpu.core_type = #tpu.core_type<tc>} {
    %c0 = arith.constant 0 : index
    %0 = memref.load %arg0[%c0] : memref<1xf32, #tpu.memory_space<smem>>
    %1 = math.exp %0 : f32
    %c0_0 = arith.constant 0 : index
    %2 = memref.load %arg1[%c0_0] : memref<1xf32, #tpu.memory_space<smem>>
    memref.store %1, %arg1[%c0_0] : memref<1xf32, #tpu.memory_space<smem>>
    return
  }
}

module attributes {stable_mosaic.version = 11 : i64} {
  func.func @_scale_exp_vmem_fallback_kernel(%arg0: memref<1xf32, #tpu.memory_space<smem>>, %arg1: memref<1x1xf32, #tpu.memory_space<vmem>>) attributes {dimension_semantics = [], scalar_prefetch = 0 : i64, scratch_operands = 0 : i64, tpu.core_type = #tpu.core_type<tc>} {
    %c0 = arith.constant 0 : index
    %0 = memref.load %arg0[%c0] : memref<1xf32, #tpu.memory_space<smem>>
    %1 = vector.broadcast %0 : f32 to vector<1x1xf32>
    %2 = math.exp %1 : vector<1x1xf32>
    %c0_0 = arith.constant 0 : index
    %c0_1 = arith.constant 0 : index
    %3 = vector.load %arg1[%c0_0, %c0_1] : memref<1x1xf32, #tpu.memory_space<vmem>>, vector<1x1xf32>
    tpu.vector_store %arg1[%c0_0, %c0_1], %2 {strides = array<i32>} : memref<1x1xf32, #tpu.memory_space<vmem>>, vector<1x1xf32>,
    return
  }
}

</mosaic_0001>

<llo_original>
// kernel: tpu_custom_call.1
$region0: #{tpu_custom_call.1}
  #allocation0 [shape = 'u32[]', space=smem, size = 0x4, offset = 0x4, fixed_abs, tag = 'smem constant byte address 0x4 - core index']
  #allocation1 [shape = 'u32[144,128]{1,0:T(1,128)}', space=vmem, size = 0x12000, scoped, tag = 'internal scratch']
  #allocation2 [shape = 'f32[1]{0:T(128)S(6)}', space=smem, size = 0x200, scoped, tag = 'scoped memory for tpu_custom_call.1']
  %s0 = inlined_call_operand.<no memory space> [shape: f32[1], index: 0, kind: input, shape index: {}]
  %s1 = inlined_call_operand.hbm [shape: f32[1], index: 1, kind: output, shape index: {}]
  %s2 = sld [smem:[#allocation0]]
  $region14: #{tpu_custom_call.1} parent=0
    _
  %s4 = ssub.s32 1, %s2
  %s5 = scalar_select 0, %s4, %s2
  %6 = sst [smem:[#allocation2]] %s0
  $region1: #{tpu_custom_call.1} parent=0
    #allocation3 [shape = 'u8[512]{0}', space=smem, size = 0x200, scoped, tag = 'output window, operand 0, single buffered']
    #allocation4 [shape = 's32[1]{0}', space=sflag, size = 0x4, scoped, tag = 'scoped memory for tpu_custom_call.1']
    %7 = vsyncpa [#allocation4], 0
    // Predicated region
    $region2: #{tpu_custom_call.1} parent=1 // pred_check
      _
    $region3: #{tpu_custom_call.1} parent=1 // pred_check_branch
      %9 = sbr.rel (0) target = $region5
    $region4: #{tpu_custom_call.1} parent=1 // pred_region
      _
    $region5: #{tpu_custom_call.1} parent=1 // pred_fallthru
      _
    %s10 = sld [smem:[#allocation2]]
    %v11 = vstv %s10
    %v12 = vmul.f32 %v11, 1.442695
    %v13 = vpow.pop %v12
    %s14 = vtos %v13
    %s15 = scalar_lea.smem [#allocation3], 0
    %16 = sst [smem:[%s15]] %s14
    // Predicated region
    $region6: #{tpu_custom_call.1} parent=1 // pred_check
      _
    $region7: #{tpu_custom_call.1} parent=1 // pred_check_branch
      %18 = sbr.rel (0) target = $region9
    $region8: #{tpu_custom_call.1} parent=1 // pred_region
      %s20 = ssub.s32 16, 16
      %21 = vsyncadd [#allocation4], %s20
      %24 = dma.smem_to_hbm [#allocation3], 16, %s1, [#allocation4]
    $region9: #{tpu_custom_call.1} parent=1 // pred_fallthru
      _
    // Predicated region
    $region10: #{tpu_custom_call.1} parent=1 // pred_check
      _
    $region11: #{tpu_custom_call.1} parent=1 // pred_check_branch
      %26 = sbr.rel (0) target = $region13
    $region12: #{tpu_custom_call.1} parent=1 // pred_region
      %27 = dma.done [#allocation4], 16
    $region13: #{tpu_custom_call.1} parent=1 // pred_fallthru
      _
    %28 = sfence
    %29 = vsyncpa [#allocation4], 1

// kernel: tpu_custom_call.1
$region0: #{tpu_custom_call.1}
  #allocation0 [shape = 'u32[]', space=smem, size = 0x4, offset = 0x4, fixed_abs, tag = 'smem constant byte address 0x4 - core index']
  #allocation1 [shape = 'u32[144,128]{1,0:T(1,128)}', space=vmem, size = 0x12000, scoped, tag = 'internal scratch']
  #allocation2 [shape = 'f32[1]{0:T(128)S(6)}', space=smem, size = 0x200, scoped, tag = 'scoped memory for tpu_custom_call.1']
  %s0 = inlined_call_operand.<no memory space> [shape: f32[1], index: 0, kind: input, shape index: {}]
  %s1 = inlined_call_operand.hbm [shape: f32[1,1], index: 1, kind: output, shape index: {}]
  %s2 = sld [smem:[#allocation0]]
  $region14: #{tpu_custom_call.1} parent=0
    _
  %s4 = ssub.s32 1, %s2
  %s5 = scalar_select 0, %s4, %s2
  %6 = sst [smem:[#allocation2]] %s0
  $region1: #{tpu_custom_call.1} parent=0
    #allocation3 [shape = 'u8[512]{0}', space=vmem, size = 0x400, scoped, tag = 'output window, operand 0, single buffered']
    #allocation4 [shape = 's32[1]{0}', space=sflag, size = 0x4, scoped, tag = 'scoped memory for tpu_custom_call.1']
    %7 = vsyncpa [#allocation4], 0
    // Predicated region
    $region2: #{tpu_custom_call.1} parent=1 // pred_check
      _
    $region3: #{tpu_custom_call.1} parent=1 // pred_check_branch
      %9 = sbr.rel (0) target = $region5
    $region4: #{tpu_custom_call.1} parent=1 // pred_region
      _
    $region5: #{tpu_custom_call.1} parent=1 // pred_fallthru
      _
    %s10 = sld [smem:[#allocation2]]
    %v11 = vstv %s10
    %v12 = vmul.f32 %v11, 1.442695
    %v13 = vpow.pop %v12
    %vm14 = vcmask 0
    %15 = vst.msk [vmem:[#allocation3] sm:$0x1] %vm14, %v13
    // Predicated region
    $region6: #{tpu_custom_call.1} parent=1 // pred_check
      _
    $region7: #{tpu_custom_call.1} parent=1 // pred_check_branch
      %17 = sbr.rel (0) target = $region9
    $region8: #{tpu_custom_call.1} parent=1 // pred_region
      %s19 = ssub.s32 16, 16
      %20 = vsyncadd [#allocation4], %s19
      %s22 = sshll.u32 [#allocation3], 4
      %s23 = int_to_ptr.vmem [resolvable:$true] %s22
      %25 = dma.vmem_to_hbm [thread:$0]  %s23, 16, %s1, [#allocation4]
    $region9: #{tpu_custom_call.1} parent=1 // pred_fallthru
      _
    // Predicated region
    $region10: #{tpu_custom_call.1} parent=1 // pred_check
      _
    $region11: #{tpu_custom_call.1} parent=1 // pred_check_branch
      %27 = sbr.rel (0) target = $region13
    $region12: #{tpu_custom_call.1} parent=1 // pred_region
      %28 = dma.done [#allocation4], 16
    $region13: #{tpu_custom_call.1} parent=1 // pred_fallthru
      _
    %29 = vsyncpa [#allocation4], 1

</llo_original>
